<compile_context>
chip_gen: v7x
topology: tpu7x:2x2x1
jax: 0.10.0
libtpu: 0.0.40
codegen_flags: <defaults>
</compile_context>

<pallas_src>
import functools

import jax
import jax.numpy as jnp
from jax.experimental import pallas as pl
from jax.experimental.pallas import tpu as pltpu


def _round_up(x: int, m: int) -> int:
    return ((x + m - 1) // m) * m


def _pick_tile(extent: int, align: int, max_tile: int) -> int:
    """Largest tile <= max_tile (multiple of `align`) with <=25% padding waste."""
    e = _round_up(extent, align)
    t = min(_round_up(max_tile, align), e)
    while t > align and (pl.cdiv(e, t) * t - e) * 4 > e:
        t = max(align, t // 2)
    return t


def _pad2(x: jax.Array, rows: int, cols: int) -> jax.Array:
    pr, pc = rows - x.shape[0], cols - x.shape[1]
    if pr == 0 and pc == 0:
        return x          # avoid an extra HBM pass when already aligned
    return jnp.pad(x, ((0, pr), (0, pc)))


# ---------------------------------------------------------------------------
# Kernel A (M <= N): fused algebraic rewrite, exact algebra:
#   out = [(adj @ src) @ W^T + rowsum(adj) * b] / (rowsum(adj) + 1e-7)
# Grid = (M tiles [parallel], N tiles [reduction]).  No fc intermediate.
# ---------------------------------------------------------------------------
def _collect_rewrite_kernel(adj_ref, src_ref, wt_ref, b_ref, out_ref,
                            acc_ref, rsum_ref, *, approx_recip):
    k = pl.program_id(1)

    @pl.when(k == 0)
    def _():
        acc_ref[...] = jnp.zeros_like(acc_ref)
        rsum_ref[...] = jnp.zeros_like(rsum_ref)

    adj = adj_ref[...]
    acc_ref[...] += jnp.dot(adj, src_ref[...], preferred_element_type=jnp.float32)
    rsum_ref[...] += jnp.sum(adj.astype(jnp.float32), axis=1, keepdims=True)

    @pl.when(k == pl.num_programs(1) - 1)
    def _():
        rsum = rsum_ref[...]
        proj = jnp.dot(acc_ref[...].astype(wt_ref.dtype), wt_ref[...],
                       preferred_element_type=jnp.float32)
        collect = proj + rsum * b_ref[...].astype(jnp.float32)
        inv = pl.reciprocal(rsum + 1e-7, approx=approx_recip)
        out_ref[...] = (collect * inv).astype(out_ref.dtype)


# ---------------------------------------------------------------------------
# Kernel B (M > N): fc = source @ W^T + b is pre-computed OUTSIDE the streamed
# kernel; the kernel streams adjacency/fc tiles and accumulates adj @ fc.
# ---------------------------------------------------------------------------
def _collect_fc_kernel(adj_ref, fc_ref, out_ref, acc_ref, rsum_ref, *,
                       approx_recip):
    k = pl.program_id(1)

    @pl.when(k == 0)
    def _():
        acc_ref[...] = jnp.zeros_like(acc_ref)
        rsum_ref[...] = jnp.zeros_like(rsum_ref)

    adj = adj_ref[...]
    acc_ref[...] += jnp.dot(adj, fc_ref[...], preferred_element_type=jnp.float32)
    rsum_ref[...] += jnp.sum(adj.astype(jnp.float32), axis=1, keepdims=True)

    @pl.when(k == pl.num_programs(1) - 1)
    def _():
        rsum = rsum_ref[...]
        inv = pl.reciprocal(rsum + 1e-7, approx=approx_recip)
        out_ref[...] = (acc_ref[...] * inv).astype(out_ref.dtype)


def collection_unit(source: jax.Array,
                    adjacent: jax.Array,
                    weight: jax.Array,
                    bias: jax.Array,
                    *,
                    mxu_dtype=jnp.bfloat16,
                    tm_max: int = 512,
                    tk_max: int = 512) -> jax.Array:
    """Pallas equivalent of _Collection_Unit.forward(source, adjacent).

    source:   (N, dim)   node features
    adjacent: (M, N)     adjacency / attention matrix
    weight:   (dim, dim) nn.Linear weight (PyTorch layout: out x in)
    bias:     (dim,)     nn.Linear bias
    mxu_dtype: dtype fed to the MXU (bf16 default; float32 for exact results).
    """
    N, dim = source.shape
    M, N2 = adjacent.shape
    assert N2 == N, "adjacent columns must match number of source rows"
    assert weight.shape == (dim, dim)
    assert bias.shape == (dim,)
    out_dtype = source.dtype
    approx = mxu_dtype != jnp.float32     # exact reciprocal on the exact path

    dim_p = _round_up(dim, 128)
    tm = _pick_tile(M, 8, tm_max)         # rows of adjacency per grid step
    tk = _pick_tile(N, 128, tk_max)       # reduction (N) chunk per grid step
    M_p = pl.cdiv(M, tm) * tm
    N_p = pl.cdiv(N, tk) * tk
    grid = (M_p // tm, N_p // tk)

    isz = jnp.dtype(mxu_dtype).itemsize
    osz = jnp.dtype(out_dtype).itemsize

    # Zero-padding is exact for this op: padded adjacency columns are zero so
    # padded source/fc rows never contribute; padded output rows/cols sliced off.
    adj_p = _pad2(adjacent.astype(mxu_dtype), M_p, N_p)

    if M <= N:
        # Fused rewrite path: no fc intermediate, fewer FLOPs when M < N.
        src_p = _pad2(source.astype(mxu_dtype), N_p, dim_p)
        wt_p = _pad2(jnp.transpose(weight).astype(mxu_dtype), dim_p, dim_p)
        b_p = jnp.pad(bias.astype(jnp.float32), (0, dim_p - dim)).reshape(1, dim_p)
        kernel = functools.partial(_collect_rewrite_kernel, approx_recip=approx)
        args = (adj_p, src_p, wt_p, b_p)
        in_specs = [
            pl.BlockSpec((tm, tk), lambda i, k: (i, k)),        # adjacency tile
            pl.BlockSpec((tk, dim_p), lambda i, k: (k, 0)),     # source tile
            pl.BlockSpec((dim_p, dim_p), lambda i, k: (0, 0)),  # W^T (grid-invariant)
            pl.BlockSpec((1, dim_p), lambda i, k: (0, 0)),      # bias (grid-invariant)
        ]
        flops = 2 * M_p * N_p * dim_p + 2 * M_p * dim_p * dim_p
        bytes_accessed = (isz * (adj_p.size + src_p.size + wt_p.size)
                          + 4 * b_p.size + osz * M_p * dim_p)
        resident = 2 * (tm * tk + tk * dim_p + dim_p * dim_p) * isz + 2 * dim_p * 4
    else:
        # fc matmul pulled out of the streamed kernel (plain XLA dot).
        fc = source @ jnp.transpose(weight) + bias
        fc_p = _pad2(fc.astype(mxu_dtype), N_p, dim_p)
        kernel = functools.partial(_collect_fc_kernel, approx_recip=approx)
        args = (adj_p, fc_p)
        in_specs = [
            pl.BlockSpec((tm, tk), lambda i, k: (i, k)),        # adjacency tile
            pl.BlockSpec((tk, dim_p), lambda i, k: (k, 0)),     # fc tile
        ]
        flops = 2 * M_p * N_p * dim_p
        bytes_accessed = isz * (adj_p.size + fc_p.size) + osz * M_p * dim_p
        resident = 2 * (tm * tk + tk * dim_p) * isz

    # output double-buffer + accumulator + rowsum scratch
    resident += 2 * tm * dim_p * osz + tm * dim_p * 4 + tm * 4
    vmem_limit = int(min(64 * 1024 * 1024, resident + (8 << 20)))

    out_p = pl.pallas_call(
        kernel,
        out_shape=jax.ShapeDtypeStruct((M_p, dim_p), out_dtype),
        grid_spec=pltpu.PrefetchScalarGridSpec(
            num_scalar_prefetch=0,
            grid=grid,
            in_specs=in_specs,
            out_specs=pl.BlockSpec((tm, dim_p), lambda i, k: (i, 0)),
            scratch_shapes=[pltpu.VMEM((tm, dim_p), jnp.float32),   # acc
                            pltpu.VMEM((tm, 1), jnp.float32)],      # row-sum
        ),
        compiler_params=pltpu.CompilerParams(
            # M tiles are independent -> "parallel" (uses both TCs on v7x);
            # the N axis carries the accumulator -> "arbitrary".
            dimension_semantics=("parallel", "arbitrary"),
            vmem_limit_bytes=vmem_limit,
        ),
        cost_estimate=pl.CostEstimate(
            flops=int(flops), transcendentals=int(M_p),
            bytes_accessed=int(bytes_accessed)),
    )(*args)

    return out_p[:M, :dim]


if __name__ == "__main__":
    key = jax.random.PRNGKey(0)
    k_src, k_adj, k_w, k_src2, k_adj2 = jax.random.split(key, 5)

    def reference(source, adjacent, weight, bias):
        fc = source @ weight.T + bias
        collect = adjacent @ fc
        return collect / (jnp.sum(adjacent, axis=1, keepdims=True) + 1e-7)

    dim = 32
    # TODO(synk): normal_init / cfg.TRAIN.TRUNCATED is host-side parameter init,
    # not part of the forward pass; emulate the non-truncated init here.
    weight = 0.001 * jax.random.normal(k_w, (dim, dim), dtype=jnp.float32)
    bias = jnp.zeros((dim,), dtype=jnp.float32)

    fn_bf16 = jax.jit(collection_unit,
                      static_argnames=("mxu_dtype", "tm_max", "tk_max"))
    fn_f32 = jax.jit(functools.partial(collection_unit, mxu_dtype=jnp.float32))

    # Case 1: M <= N  -> fused algebraic-rewrite kernel.
    N, M = 16, 8
    source = jax.random.normal(k_src, (N, dim), dtype=jnp.float32)
    adjacent = jax.random.uniform(k_adj, (M, N), dtype=jnp.float32)
    ref = reference(source, adjacent, weight, bias)

    out = jax.block_until_ready(fn_bf16(source, adjacent, weight, bias))
    assert out.shape == ref.shape and out.dtype == ref.dtype
    assert jnp.allclose(out, ref, atol=1e-3, rtol=2e-2), \
        float(jnp.max(jnp.abs(out - ref)))

    out32 = jax.block_until_ready(fn_f32(source, adjacent, weight, bias))
    assert jnp.allclose(out32, ref, atol=1e-5, rtol=1e-4), \
        float(jnp.max(jnp.abs(out32 - ref)))

    # Case 2: M > N  -> fc pre-computed outside the streamed kernel.
    N2_, M2_ = 16, 40
    source2 = jax.random.normal(k_src2, (N2_, dim), dtype=jnp.float32)
    adjacent2 = jax.random.uniform(k_adj2, (M2_, N2_), dtype=jnp.float32)
    ref2 = reference(source2, adjacent2, weight, bias)

    out2 = jax.block_until_ready(fn_bf16(source2, adjacent2, weight, bias))
    assert jnp.allclose(out2, ref2, atol=1e-3, rtol=2e-2), \
        float(jnp.max(jnp.abs(out2 - ref2)))

    out2_32 = jax.block_until_ready(fn_f32(source2, adjacent2, weight, bias))
    assert jnp.allclose(out2_32, ref2, atol=1e-5, rtol=1e-4), \
        float(jnp.max(jnp.abs(out2_32 - ref2)))

    print("KERNEL_OK")
</pallas_src>

<mosaic_0001>
module attributes {stable_mosaic.version = 11 : i64} {
  func.func @_collect_rewrite_kernel(%arg0: i32, %arg1: i32, %arg2: memref<8x128xbf16, #tpu.memory_space<vmem>>, %arg3: memref<128x128xbf16, #tpu.memory_space<vmem>>, %arg4: memref<128x128xbf16, #tpu.memory_space<vmem>>, %arg5: memref<1x128xf32, #tpu.memory_space<vmem>>, %arg6: memref<8x128xf32, #tpu.memory_space<vmem>>, %arg7: memref<8x128xf32, #tpu.memory_space<vmem>>, %arg8: memref<8x1xf32, #tpu.memory_space<vmem>>) attributes {dimension_semantics = [#tpu.dimension_semantics<parallel>, #tpu.dimension_semantics<arbitrary>], iteration_bounds = array<i64: 1, 1>, scalar_prefetch = 0 : i64, scratch_operands = 2 : i64, tpu.core_type = #tpu.core_type<tc>, window_params = [{transform_indices = @transform_0, window_bounds = array<i64: 8, 128>}, {transform_indices = @transform_1, window_bounds = array<i64: 128, 128>}, {pipeline_mode = #tpu.pipeline_mode<synchronous>, transform_indices = @transform_2, window_bounds = array<i64: 128, 128>}, {pipeline_mode = #tpu.pipeline_mode<synchronous>, transform_indices = @transform_3, window_bounds = array<i64: 1, 128>}, {transform_indices = @transform_4, window_bounds = array<i64: 8, 128>}]} {
    %c0_i32 = arith.constant 0 : i32
    %0 = arith.cmpi eq, %arg1, %c0_i32 : i32
    %1 = arith.extui %0 : i1 to i32
    %c0_i32_0 = arith.constant 0 : i32
    %2 = arith.cmpi ne, %1, %c0_i32_0 : i32
    scf.if %2 {
      %cst_15 = arith.constant 0.000000e+00 : f32
      %18 = vector.broadcast %cst_15 : f32 to vector<8x128xf32>
      %c0_16 = arith.constant 0 : index
      %c0_17 = arith.constant 0 : index
      %19 = vector.load %arg7[%c0_16, %c0_17] : memref<8x128xf32, #tpu.memory_space<vmem>>, vector<8x128xf32>
      tpu.vector_store %arg7[%c0_16, %c0_17], %18 {strides = array<i32>} : memref<8x128xf32, #tpu.memory_space<vmem>>, vector<8x128xf32>,
      %cst_18 = arith.constant 0.000000e+00 : f32
      %20 = vector.broadcast %cst_18 : f32 to vector<8x1xf32>
      %c0_19 = arith.constant 0 : index
      %c0_20 = arith.constant 0 : index
      %21 = vector.load %arg8[%c0_19, %c0_20] : memref<8x1xf32, #tpu.memory_space<vmem>>, vector<8x1xf32>
      tpu.vector_store %arg8[%c0_19, %c0_20], %20 {strides = array<i32>} : memref<8x1xf32, #tpu.memory_space<vmem>>, vector<8x1xf32>,
    } else {
    }
    %c0 = arith.constant 0 : index
    %c0_1 = arith.constant 0 : index
    %3 = vector.load %arg2[%c0, %c0_1] : memref<8x128xbf16, #tpu.memory_space<vmem>>, vector<8x128xbf16>
    %c0_2 = arith.constant 0 : index
    %c0_3 = arith.constant 0 : index
    %4 = vector.load %arg7[%c0_2, %c0_3] : memref<8x128xf32, #tpu.memory_space<vmem>>, vector<8x128xf32>
    %c0_4 = arith.constant 0 : index
    %c0_5 = arith.constant 0 : index
    %5 = vector.load %arg3[%c0_4, %c0_5] : memref<128x128xbf16, #tpu.memory_space<vmem>>, vector<128x128xbf16>
    %cst = arith.constant dense<0.000000e+00> : vector<8x128xf32>
    %6 = tpu.matmul %3, %5, %cst {dimension_numbers = #tpu.dot_dimension_numbers<[1], [0], [0], [1], [0, 0, 1, 1], [], []>} : vector<8x128xbf16>, vector<128x128xbf16>, vector<8x128xf32> -> vector<8x128xf32>
    %7 = arith.addf %4, %6 : vector<8x128xf32>
    %c0_6 = arith.constant 0 : index
    %c0_7 = arith.constant 0 : index
    %8 = vector.load %arg7[%c0_6, %c0_7] : memref<8x128xf32, #tpu.memory_space<vmem>>, vector<8x128xf32>
    tpu.vector_store %arg7[%c0_6, %c0_7], %7 {strides = array<i32>} : memref<8x128xf32, #tpu.memory_space<vmem>>, vector<8x128xf32>,
    %c0_8 = arith.constant 0 : index
    %c0_9 = arith.constant 0 : index
    %9 = vector.load %arg8[%c0_8, %c0_9] : memref<8x1xf32, #tpu.memory_space<vmem>>, vector<8x1xf32>
    %10 = arith.extf %3 : vector<8x128xbf16> to vector<8x128xf32>
    %cst_10 = arith.constant dense<0.000000e+00> : vector<8xf32>
    %11 = vector.multi_reduction <add>, %10, %cst_10 [1] : vector<8x128xf32> to vector<8xf32>
    %12 = vector.shape_cast %11 : vector<8xf32> to vector<8x1xf32>
    %13 = arith.addf %9, %12 : vector<8x1xf32>
    %c0_11 = arith.constant 0 : index
    %c0_12 = arith.constant 0 : index
    %14 = vector.load %arg8[%c0_11, %c0_12] : memref<8x1xf32, #tpu.memory_space<vmem>>, vector<8x1xf32>
    tpu.vector_store %arg8[%c0_11, %c0_12], %13 {strides = array<i32>} : memref<8x1xf32, #tpu.memory_space<vmem>>, vector<8x1xf32>,
    %c0_i32_13 = arith.constant 0 : i32
    %15 = arith.cmpi eq, %arg1, %c0_i32_13 : i32
    %16 = arith.extui %15 : i1 to i32
    %c0_i32_14 = arith.constant 0 : i32
    %17 = arith.cmpi ne, %16, %c0_i32_14 : i32
    scf.if %17 {
      %c0_15 = arith.constant 0 : index
      %c0_16 = arith.constant 0 : index
      %18 = vector.load %arg8[%c0_15, %c0_16] : memref<8x1xf32, #tpu.memory_space<vmem>>, vector<8x1xf32>
      %c0_17 = arith.constant 0 : index
      %c0_18 = arith.constant 0 : index
      %19 = vector.load %arg7[%c0_17, %c0_18] : memref<8x128xf32, #tpu.memory_space<vmem>>, vector<8x128xf32>
      %20 = arith.truncf %19 : vector<8x128xf32> to vector<8x128xbf16>
      %c0_19 = arith.constant 0 : index
      %c0_20 = arith.constant 0 : index
      %21 = vector.load %arg4[%c0_19, %c0_20] : memref<128x128xbf16, #tpu.memory_space<vmem>>, vector<128x128xbf16>
      %cst_21 = arith.constant dense<0.000000e+00> : vector<8x128xf32>
      %22 = tpu.matmul %20, %21, %cst_21 {dimension_numbers = #tpu.dot_dimension_numbers<[1], [0], [0], [1], [0, 0, 1, 1], [], []>} : vector<8x128xbf16>, vector<128x128xbf16>, vector<8x128xf32> -> vector<8x128xf32>
      %c0_22 = arith.constant 0 : index
      %c0_23 = arith.constant 0 : index
      %23 = vector.load %arg5[%c0_22, %c0_23] : memref<1x128xf32, #tpu.memory_space<vmem>>, vector<1x128xf32>
      %24 = vector.broadcast %18 : vector<8x1xf32> to vector<8x128xf32>
      %25 = vector.broadcast %23 : vector<1x128xf32> to vector<8x128xf32>
      %26 = arith.mulf %24, %25 : vector<8x128xf32>
      %27 = arith.addf %22, %26 : vector<8x128xf32>
      %cst_24 = arith.constant 1.000000e-07 : f32
      %28 = vector.broadcast %cst_24 : f32 to vector<8x1xf32>
      %29 = arith.addf %18, %28 : vector<8x1xf32>
      %30 = tpu.reciprocal %29 {approx = true} : vector<8x1xf32> -> vector<8x1xf32>
      %31 = vector.broadcast %30 : vector<8x1xf32> to vector<8x128xf32>
      %32 = arith.mulf %27, %31 : vector<8x128xf32>
      %c0_25 = arith.constant 0 : index
      %c0_26 = arith.constant 0 : index
      %33 = vector.load %arg6[%c0_25, %c0_26] : memref<8x128xf32, #tpu.memory_space<vmem>>, vector<8x128xf32>
      tpu.vector_store %arg6[%c0_25, %c0_26], %32 {strides = array<i32>} : memref<8x128xf32, #tpu.memory_space<vmem>>, vector<8x128xf32>,
    } else {
    }
    return
  }
  func.func @transform_0(%arg0: i32, %arg1: i32) -> (i32, i32) {
    %c0_i32 = arith.constant 0 : i32
    return %arg0, %arg1 : i32, i32
  }
  func.func @transform_1(%arg0: i32, %arg1: i32) -> (i32, i32) {
    %c0_i32 = arith.constant 0 : i32
    %c0_i32_0 = arith.constant 0 : i32
    return %arg1, %c0_i32 : i32, i32
  }
  func.func @transform_2(%arg0: i32, %arg1: i32) -> (i32, i32) {
    %c0_i32 = arith.constant 0 : i32
    %c0_i32_0 = arith.constant 0 : i32
    %c0_i32_1 = arith.constant 0 : i32
    return %c0_i32, %c0_i32_0 : i32, i32
  }
  func.func @transform_3(%arg0: i32, %arg1: i32) -> (i32, i32) {
    %c0_i32 = arith.constant 0 : i32
    %c0_i32_0 = arith.constant 0 : i32
    %c0_i32_1 = arith.constant 0 : i32
    return %c0_i32, %c0_i32_0 : i32, i32
  }
  func.func @transform_4(%arg0: i32, %arg1: i32) -> (i32, i32) {
    %c0_i32 = arith.constant 0 : i32
    %c0_i32_0 = arith.constant 0 : i32
    return %arg0, %c0_i32 : i32, i32
  }
}

</mosaic_0001>

<llo_original>
// kernel: collection_unit.1
$region0: #{collection_unit.1}
  #allocation0 [shape = 'u32[]', space=smem, size = 0x4, offset = 0x4, fixed_abs, tag = 'smem constant byte address 0x4 - core index']
  #allocation1 [shape = 'u32[144,128]{1,0:T(1,128)}', space=vmem, size = 0x12000, scoped, tag = 'internal scratch']
  #allocation2 [shape = 'f32[8,128]{1,0:T(8,128)}', space=vmem, size = 0x1000, scoped, tag = 'scratch operand']
  #allocation3 [shape = 'f32[8,1]{1,0:T(8,128)}', space=vmem, size = 0x1000, scoped, tag = 'scratch operand']
  %s0 = inlined_call_operand.vmem [shape: bf16[8,128], index: 0, kind: input, shape index: {}]
  %s1 = inlined_call_operand.vmem [shape: bf16[128,128], index: 1, kind: input, shape index: {}]
  %s2 = inlined_call_operand.vmem [shape: bf16[128,128], index: 2, kind: input, shape index: {}]
  %s3 = inlined_call_operand.vmem [shape: f32[1,128], index: 3, kind: input, shape index: {}]
  %s4 = inlined_call_operand.hbm [shape: f32[8,128], index: 4, kind: output, shape index: {}]
  %s5 = sld [smem:[#allocation0]]
  $region34: #{collection_unit.1} parent=0
    _
  %s7 = ssub.s32 1, %s5
  %s8 = scalar_select 0, %s7, %s5
  $region1: #{collection_unit.1} parent=0
    #allocation4 [shape = 'u8[4096]{0}', space=vmem, size = 0x1000, scoped, tag = 'output window, operand 0, single buffered']
    #allocation5 [shape = 's32[1]{0}', space=sflag, size = 0x4, scoped, tag = 'scoped memory for collection_unit.1']
    %9 = vsyncpa [#allocation5], 0
    // Predicated region
    $region2: #{collection_unit.1} parent=1 // pred_check
      _
    $region3: #{collection_unit.1} parent=1 // pred_check_branch
      %11 = sbr.rel (0) target = $region5
    $region4: #{collection_unit.1} parent=1 // pred_region
      _
    $region5: #{collection_unit.1} parent=1 // pred_fallthru
      _
    // Predicated region
    $region6: #{collection_unit.1} parent=1 // pred_check
      _
    $region7: #{collection_unit.1} parent=1 // pred_check_branch
      %13 = sbr.rel (0) target = $region9
    $region8: #{collection_unit.1} parent=1 // pred_region
      _
    $region9: #{collection_unit.1} parent=1 // pred_fallthru
      _
    // Predicated region
    $region10: #{collection_unit.1} parent=1 // pred_check
      _
    $region11: #{collection_unit.1} parent=1 // pred_check_branch
      %15 = sbr.rel (0) target = $region13
    $region12: #{collection_unit.1} parent=1 // pred_region
      _
    $region13: #{collection_unit.1} parent=1 // pred_fallthru
      _
    // Predicated region
    $region14: #{collection_unit.1} parent=1 // pred_check
      _
    $region15: #{collection_unit.1} parent=1 // pred_check_branch
      %17 = sbr.rel (0) target = $region17
    $region16: #{collection_unit.1} parent=1 // pred_region
      _
    $region17: #{collection_unit.1} parent=1 // pred_fallthru
      _
    %p19 = scmp.eq.s32.totalorder 0, 0
    // Predicated region
    $region18: #{collection_unit.1} parent=1 // pred_check
      %p20 = pneg %p19
    $region19: #{collection_unit.1} parent=1 // pred_check_branch
      %22 = sbr.rel (%p20) target = $region21
    $region20: #{collection_unit.1} parent=1 // pred_region
      %23 = vst [vmem:[#allocation2] sm:$0xff] 0.0
      %vm24 = vcmask 7168
      %25 = vst.msk [vmem:[#allocation3] sm:$0xff] %vm24, 0.0
    $region21: #{collection_unit.1} parent=1 // pred_fallthru
      _
    %v26 = vld [vmem:[%s0] sm:$0xf]
    %v27 = vld [vmem:[#allocation2] sm:$0xff]
    %v28 = vld [vmem:[%s1] sm:$0xf]
    %v29 = vld [vmem:[%s1 + $0x4] sm:$0xf]
    %v30 = vld [vmem:[%s1 + $0x8] sm:$0xf]
    %v31 = vld [vmem:[%s1 + $0xc] sm:$0xf]
    %v32 = vld [vmem:[%s1 + $0x10] sm:$0xf]
    %v33 = vld [vmem:[%s1 + $0x14] sm:$0xf]
    %v34 = vld [vmem:[%s1 + $0x18] sm:$0xf]
    %v35 = vld [vmem:[%s1 + $0x1c] sm:$0xf]
    %v36 = vld [vmem:[%s1 + $0x20] sm:$0xf]
    %v37 = vld [vmem:[%s1 + $0x24] sm:$0xf]
    %v38 = vld [vmem:[%s1 + $0x28] sm:$0xf]
    %v39 = vld [vmem:[%s1 + $0x2c] sm:$0xf]
    %v40 = vld [vmem:[%s1 + $0x30] sm:$0xf]
    %v41 = vld [vmem:[%s1 + $0x34] sm:$0xf]
    %v42 = vld [vmem:[%s1 + $0x38] sm:$0xf]
    %v43 = vld [vmem:[%s1 + $0x3c] sm:$0xf]
    %v60 = vunpack.c.l.b16 %v28
    %v61 = vunpack.c.l.b16 %v29
    %v62 = vunpack.c.l.b16 %v30
    %v63 = vunpack.c.l.b16 %v31
    %v64 = vunpack.c.l.b16 %v32
    %v65 = vunpack.c.l.b16 %v33
    %v66 = vunpack.c.l.b16 %v34
    %v67 = vunpack.c.l.b16 %v35
    %v68 = vunpack.c.l.b16 %v36
    %v69 = vunpack.c.l.b16 %v37
    %v70 = vunpack.c.l.b16 %v38
    %v71 = vunpack.c.l.b16 %v39
    %v72 = vunpack.c.l.b16 %v40
    %v73 = vunpack.c.l.b16 %v41
    %v74 = vunpack.c.l.b16 %v42
    %v75 = vunpack.c.l.b16 %v43
    %v76 = vpack.c.b16 %v61, %v60
    %v77 = vpack.c.b16 %v63, %v62
    %v78 = vpack.c.b16 %v65, %v64
    %v79 = vpack.c.b16 %v67, %v66
    %v80 = vpack.c.b16 %v69, %v68
    %v81 = vpack.c.b16 %v71, %v70
    %v82 = vpack.c.b16 %v73, %v72
    %v83 = vpack.c.b16 %v75, %v74
    %92 = vmatprep.subr.bf16.mxu0 0
    %93 = vmatpush1.bf16.msra.mxu0 %v76
    %94 = vmatprep.subr.bf16.mxu0 0
    %95 = vmatpush1.bf16.msra.mxu0 %v77
    %96 = vmatprep.subr.bf16.mxu0 0
    %97 = vmatpush1.bf16.msra.mxu0 %v78
    %98 = vmatprep.subr.bf16.mxu0 0
    %99 = vmatpush1.bf16.msra.mxu0 %v79
    %100 = vmatprep.subr.bf16.mxu0 0
    %101 = vmatpush1.bf16.msra.mxu0 %v80
    %102 = vmatprep.subr.bf16.mxu0 0
    %103 = vmatpush1.bf16.msra.mxu0 %v81
    %104 = vmatprep.subr.bf16.mxu0 0
    %105 = vmatpush1.bf16.msra.mxu0 %v82
    %106 = vmatprep.subr.bf16.mxu0 0
    %107 = vmatpush1.bf16.msra.mxu0 %v83
    %108 = vmatprep.subr.bf16.mxu0 0
    %109 = vmatpush1.bf16.msra.mxu0 0
    %110 = vmatprep.subr.bf16.mxu0 0
    %111 = vmatpush1.bf16.msra.mxu0 0
    %112 = vmatprep.subr.bf16.mxu0 0
    %113 = vmatpush1.bf16.msra.mxu0 0
    %114 = vmatprep.subr.bf16.mxu0 0
    %115 = vmatpush1.bf16.msra.mxu0 0
    %116 = vmatprep.subr.bf16.mxu0 0
    %117 = vmatpush1.bf16.msra.mxu0 0
    %118 = vmatprep.subr.bf16.mxu0 0
    %119 = vmatpush1.bf16.msra.mxu0 0
    %120 = vmatprep.subr.bf16.mxu0 0
    %121 = vmatpush1.bf16.msra.mxu0 0
    %122 = vmatprep.subr.bf16.mxu0 0
    %123 = vmatpush1.bf16.msra.mxu0 0
    %124 = vmatprep.mubr.bf16.mxu0 0
    %125 = vmatmul.mubr.bf16.gmra.mrb[0].mxu0 %v26
    %v126 = vpop.f32.mrb[0].mxu0
    %v127 = vadd.f32 0.0, %v126
    %v128 = vpop.f32.mrb[0].mxu0
    %v129 = vpop.f32.mrb[0].mxu0
    %v130 = vpop.f32.mrb[0].mxu0
    %131 = vdwg.mxu0
    %v132 = vadd.f32 %v27, %v127
    %133 = vst [vmem:[#allocation2] sm:$0xff] %v132
    %v134 = vld [vmem:[#allocation3] sm:$0xff]
    %v135 = vunpack.c.l.bf16 %v26
    %136 = vadd.xlane.f32.xlu0 %v135
    %v137 = vpop.xlane.xlu0 %136
    %v138 = vadd.f32 %v134, %v137
    %vm139 = vcmask 7168
    %140 = vst.msk [vmem:[#allocation3] sm:$0xff] %vm139, %v138
    // Predicated region
    $region22: #{collection_unit.1} parent=1 // pred_check
      %p141 = pneg %p19
    $region23: #{collection_unit.1} parent=1 // pred_check_branch
      %143 = sbr.rel (%p141) target = $region25
    $region24: #{collection_unit.1} parent=1 // pred_region
      %v144 = vld [vmem:[#allocation3] sm:$0xff]
      %v145 = vld [vmem:[#allocation2] sm:$0xff]
      %v146 = vpack.c.bf16 %v145, %v145
      %v147 = vld [vmem:[%s2] sm:$0xf]
      %v148 = vld [vmem:[%s2 + $0x4] sm:$0xf]
      %v149 = vld [vmem:[%s2 + $0x8] sm:$0xf]
      %v150 = vld [vmem:[%s2 + $0xc] sm:$0xf]
      %v151 = vld [vmem:[%s2 + $0x10] sm:$0xf]
      %v152 = vld [vmem:[%s2 + $0x14] sm:$0xf]
      %v153 = vld [vmem:[%s2 + $0x18] sm:$0xf]
      %v154 = vld [vmem:[%s2 + $0x1c] sm:$0xf]
      %v155 = vld [vmem:[%s2 + $0x20] sm:$0xf]
      %v156 = vld [vmem:[%s2 + $0x24] sm:$0xf]
      %v157 = vld [vmem:[%s2 + $0x28] sm:$0xf]
      %v158 = vld [vmem:[%s2 + $0x2c] sm:$0xf]
      %v159 = vld [vmem:[%s2 + $0x30] sm:$0xf]
      %v160 = vld [vmem:[%s2 + $0x34] sm:$0xf]
      %v161 = vld [vmem:[%s2 + $0x38] sm:$0xf]
      %v162 = vld [vmem:[%s2 + $0x3c] sm:$0xf]
      %v163 = vld [vmem:[%s3] sm:$0x1]
      %165 = vset.pattern.permute.xlu0 0
      %166 = vperm.xlu0 %165, %v144
      %v167 = vpop.permute.xlu0 %166
      %v170 = vlaneseq
      %v171 = vshrl.u32 %v170, 7
      %v172 = vsub.s32 0, %v171
      %v173 = vrot.slane %v163, %v172
      %v175 = vmul.f32 %v167, %v173
      %v192 = vunpack.c.l.b16 %v147
      %v193 = vunpack.c.l.b16 %v148
      %v194 = vunpack.c.l.b16 %v149
      %v195 = vunpack.c.l.b16 %v150
      %v196 = vunpack.c.l.b16 %v151
      %v197 = vunpack.c.l.b16 %v152
      %v198 = vunpack.c.l.b16 %v153
      %v199 = vunpack.c.l.b16 %v154
      %v200 = vunpack.c.l.b16 %v155
      %v201 = vunpack.c.l.b16 %v156
      %v202 = vunpack.c.l.b16 %v157
      %v203 = vunpack.c.l.b16 %v158
      %v204 = vunpack.c.l.b16 %v159
      %v205 = vunpack.c.l.b16 %v160
      %v206 = vunpack.c.l.b16 %v161
      %v207 = vunpack.c.l.b16 %v162
      %v208 = vpack.c.b16 %v193, %v192
      %v209 = vpack.c.b16 %v195, %v194
      %v210 = vpack.c.b16 %v197, %v196
      %v211 = vpack.c.b16 %v199, %v198
      %v212 = vpack.c.b16 %v201, %v200
      %v213 = vpack.c.b16 %v203, %v202
      %v214 = vpack.c.b16 %v205, %v204
      %v215 = vpack.c.b16 %v207, %v206
      %224 = vmatprep.subr.bf16.mxu0 0
      %225 = vmatpush1.bf16.msra.mxu0 %v208
      %226 = vmatprep.subr.bf16.mxu0 0
      %227 = vmatpush1.bf16.msra.mxu0 %v209
      %228 = vmatprep.subr.bf16.mxu0 0
      %229 = vmatpush1.bf16.msra.mxu0 %v210
      %230 = vmatprep.subr.bf16.mxu0 0
      %231 = vmatpush1.bf16.msra.mxu0 %v211
      %232 = vmatprep.subr.bf16.mxu0 0
      %233 = vmatpush1.bf16.msra.mxu0 %v212
      %234 = vmatprep.subr.bf16.mxu0 0
      %235 = vmatpush1.bf16.msra.mxu0 %v213
      %236 = vmatprep.subr.bf16.mxu0 0
      %237 = vmatpush1.bf16.msra.mxu0 %v214
      %238 = vmatprep.subr.bf16.mxu0 0
      %239 = vmatpush1.bf16.msra.mxu0 %v215
      %240 = vmatprep.subr.bf16.mxu0 0
      %241 = vmatpush1.bf16.msra.mxu0 0
      %242 = vmatprep.subr.bf16.mxu0 0
      %243 = vmatpush1.bf16.msra.mxu0 0
      %244 = vmatprep.subr.bf16.mxu0 0
      %245 = vmatpush1.bf16.msra.mxu0 0
      %246 = vmatprep.subr.bf16.mxu0 0
      %247 = vmatpush1.bf16.msra.mxu0 0
      %248 = vmatprep.subr.bf16.mxu0 0
      %249 = vmatpush1.bf16.msra.mxu0 0
      %250 = vmatprep.subr.bf16.mxu0 0
      %251 = vmatpush1.bf16.msra.mxu0 0
      %252 = vmatprep.subr.bf16.mxu0 0
      %253 = vmatpush1.bf16.msra.mxu0 0
      %254 = vmatprep.subr.bf16.mxu0 0
      %255 = vmatpush1.bf16.msra.mxu0 0
      %256 = vmatprep.mubr.bf16.mxu0 0
      %257 = vmatmul.mubr.bf16.gmra.mrb[0].mxu0 %v146
      %v258 = vpop.f32.mrb[0].mxu0
      %v259 = vadd.f32 %v175, %v258
      %v260 = vpop.f32.mrb[0].mxu0
      %v261 = vpop.f32.mrb[0].mxu0
      %v262 = vpop.f32.mrb[0].mxu0
      %263 = vdwg.mxu0
      %v264 = vadd.f32 %v144, 1e-07
      %v265 = vrcp.pop %v264
      %267 = vset.pattern.permute.xlu0 0
      %268 = vperm.xlu0 %267, %v265
      %v269 = vpop.permute.xlu0 %268
      %v271 = vmul.f32 %v259, %v269
      %272 = vst [vmem:[#allocation4] sm:$0xff] %v271
    $region25: #{collection_unit.1} parent=1 // pred_fallthru
      _
    // Predicated region
    $region26: #{collection_unit.1} parent=1 // pred_check
      _
    $region27: #{collection_unit.1} parent=1 // pred_check_branch
      %274 = sbr.rel (0) target = $region29
    $region28: #{collection_unit.1} parent=1 // pred_region
      %s276 = ssub.s32 128, 128
      %277 = vsyncadd [#allocation5], %s276
      %s279 = sshll.u32 [#allocation4], 4
      %s280 = int_to_ptr.vmem [resolvable:$true] %s279
      %282 = dma.vmem_to_hbm [thread:$0]  %s280, 128, %s4, [#allocation5]
    $region29: #{collection_unit.1} parent=1 // pred_fallthru
      _
    // Predicated region
    $region30: #{collection_unit.1} parent=1 // pred_check
      _
    $region31: #{collection_unit.1} parent=1 // pred_check_branch
      %284 = sbr.rel (0) target = $region33
    $region32: #{collection_unit.1} parent=1 // pred_region
      %285 = dma.done [#allocation5], 128
    $region33: #{collection_unit.1} parent=1 // pred_fallthru
      _
    %286 = vsyncpa [#allocation5], 1

</llo_original>
